<compile_context>
chip_gen: v7x
topology: tpu7x:2x2x1
jax: 0.10.0
libtpu: 0.0.40
codegen_flags: <defaults>
</compile_context>

<pallas_src>
import math

import jax
import jax.numpy as jnp
from jax.experimental import pallas as pl
from jax.experimental.pallas import tpu as pltpu


_LANE = 128                # vreg lane width
_MAX_SINGLE_TILE = 1024    # batch rows handled in one grid step (VMEM use is tiny here)


def _round_up(x, m):
    return ((x + m - 1) // m) * m


def pack_linear_r_deep_network_params(w1, b1, w2, b2, dtype=jnp.bfloat16):
    """One-time packing of parameters for the Pallas forward pass.

    w1: [D, H], b1: [H], w2: [H, A], b2: [A]   (weights stored [in, out], i.e. the
    transpose of torch's nn.Linear [out, in] layout, so the kernel computes x @ W + b).

    Layout (do this at weight-load time, NOT per forward call):
      wb1: [D + 1, HP]  -- W1 in [:D, :H], b1 in row D, columns H..HP-1 zero.
      wb2: [HP + 1, AP] -- W2 in [:H, :A], b2 in row HP, rows H..HP-1 zero.
    NOTE: the padded columns of wb1 and padded rows of wb2 MUST stay zero-filled:
    hidden lanes H..HP-1 then evaluate to ReLU(0) = 0 and are additionally multiplied
    by wb2's zero rows, so fc_2 only ever sees the real H hidden units.  Folding each
    bias as an extra row keeps the kernel at 3 input DMAs.
    """
    D, H = w1.shape
    A = w2.shape[1]
    HP = _round_up(H, _LANE)
    AP = _round_up(A, _LANE)
    wb1 = jnp.zeros((D + 1, HP), jnp.float32)
    wb1 = wb1.at[:D, :H].set(w1.astype(jnp.float32)).at[D, :H].set(b1.astype(jnp.float32))
    wb2 = jnp.zeros((HP + 1, AP), jnp.float32)
    wb2 = wb2.at[:H, :A].set(w2.astype(jnp.float32)).at[HP, :A].set(b2.astype(jnp.float32))
    return wb1.astype(dtype), wb2.astype(dtype)


def _mlp_sigmoid_kernel(x_ref, wb1_ref, wb2_ref, out_ref):
    d = x_ref.shape[1]        # input features
    hp = wb1_ref.shape[1]     # lane-padded hidden width
    a = out_ref.shape[1]      # true number of actions

    x = x_ref[...]

    # fc_1 + act_1 (ReLU).  Weights are bf16; accumulate in f32 on the MXU.
    w1 = wb1_ref[:d, :]
    b1 = wb1_ref[d:d + 1, :]
    h = jnp.dot(x, w1, preferred_element_type=jnp.float32) + b1
    h = jnp.maximum(h, 0.0)

    # dropout1: identity at inference time.
    # TODO(synk): training-mode dropout would use pltpu.prng_seed + pltpu.stateful_bernoulli.

    # fc_2
    w2 = wb2_ref[:hp, :]
    b2 = wb2_ref[hp:hp + 1, :]
    logits = jnp.dot(h, w2, preferred_element_type=jnp.float32) + b2
    logits = logits[:, :a]    # drop padded lanes in-register; only A lanes reach HBM

    # act_2: numerically stable sigmoid (never exponentiates a positive value).
    z = jnp.exp(-jnp.abs(logits))
    sig = 1.0 / (1.0 + z)
    out_ref[...] = jnp.where(logits >= 0.0, sig, 1.0 - sig)


def _pick_batch_tile(batch):
    if batch <= _MAX_SINGLE_TILE:
        return batch          # one full-extent tile: no padding, no per-step overhead
    # Large batches: 256-row multiples fill the 256x256 MXU on v6e/v7x (fine on v5e's
    # 128x128 too); prefer a tile that divides B so jnp.pad is never needed.
    for tb in (1024, 512, 256):
        if batch % tb == 0:
            return tb
    return 256                # ragged large batch -> rare padding fallback below


def linear_r_deep_network_forward(state, wb1, wb2, *, hidden_size, n_actions):
    """Inference-mode forward. state: [B, D] float; wb1/wb2: packed params (see pack_*)."""
    B, D = state.shape
    HP = wb1.shape[1]
    AP = wb2.shape[1]
    A = n_actions
    assert wb1.shape[0] == D + 1 and wb2.shape[0] == HP + 1 and A <= AP

    tb = _pick_batch_tile(B)
    num_tiles = pl.cdiv(B, tb)
    Bp = num_tiles * tb
    x = state if Bp == B else jnp.pad(state, ((0, Bp - B), (0, 0)))  # ragged fallback only

    # VMEM budget guard (matters only if tb is scaled way up; v7x scoped default ~32 MiB):
    # double-buffered x/out tiles + the two resident weight slabs.
    vmem_bytes = (2 * tb * D * x.dtype.itemsize + 2 * tb * A * 4
                  + wb1.size * wb1.dtype.itemsize + wb2.size * wb2.dtype.itemsize)
    assert vmem_bytes < 32 * 1024 * 1024, "shrink the batch tile or raise vmem_limit_bytes"

    # Advisory cost with true (un-padded) dims so XLA does not over-serialize neighbors.
    cost = pl.CostEstimate(
        flops=2 * B * (D * hidden_size + hidden_size * A),
        transcendentals=B * A,
        bytes_accessed=(state.size * state.dtype.itemsize
                        + wb1.size * wb1.dtype.itemsize
                        + wb2.size * wb2.dtype.itemsize
                        + B * A * 4),
    )

    out = pl.pallas_call(
        _mlp_sigmoid_kernel,
        out_shape=jax.ShapeDtypeStruct((Bp, A), jnp.float32),
        grid=(num_tiles,),
        in_specs=[
            pl.BlockSpec((tb, D), lambda i: (i, 0)),        # streamed activations
            pl.BlockSpec(wb1.shape, lambda i: (0, 0)),      # resident packed W1 | b1
            pl.BlockSpec(wb2.shape, lambda i: (0, 0)),      # resident packed W2 | b2
        ],
        out_specs=pl.BlockSpec((tb, A), lambda i: (i, 0)),  # true-width output, no padding
        compiler_params=pltpu.CompilerParams(
            # Megacore split only pays once each TC gets well over the ~0.35 us/step
            # overhead of work; the single-tile common case stays on one core.
            dimension_semantics=("parallel",) if num_tiles > 1 else ("arbitrary",),
        ),
        cost_estimate=cost,
    )(x, wb1, wb2)

    return out if Bp == B else out[:B]


def xavier_uniform(key, fan_in, fan_out):
    # Same math as torch.nn.init.xavier_uniform_ (gain=1) on a [out, in] weight,
    # produced directly in [in, out] layout.
    bound = math.sqrt(6.0 / (fan_in + fan_out))
    return jax.random.uniform(key, (fan_in, fan_out), jnp.float32, -bound, bound)


if __name__ == "__main__":
    # Module hyperparameters.
    input_dims = 32
    hidden_size = 16
    n_actions = 4
    dropout_ratio = 0.1    # inference mode -> dropout is identity
    batch = 256            # collapses to a single 256-row batch tile (one grid step)

    key = jax.random.PRNGKey(0)
    k_x, k_w1, k_w2 = jax.random.split(key, 3)

    # Deterministic parameter init: xavier_uniform weights, biases filled with 0.01.
    w1 = xavier_uniform(k_w1, input_dims, hidden_size)   # [D, H]
    b1 = jnp.full((hidden_size,), 0.01, jnp.float32)     # [H]
    w2 = xavier_uniform(k_w2, hidden_size, n_actions)    # [H, A]
    b2 = jnp.full((n_actions,), 0.01, jnp.float32)       # [A]

    state = jax.random.normal(k_x, (batch, input_dims), jnp.float32)  # [B, D]

    # One-time packing, outside the hot path (bf16 halves weight DMA bytes).
    wb1, wb2 = pack_linear_r_deep_network_params(w1, b1, w2, b2, dtype=jnp.bfloat16)

    fwd = jax.jit(linear_r_deep_network_forward,
                  static_argnames=("hidden_size", "n_actions"))
    out = jax.block_until_ready(
        fwd(state, wb1, wb2, hidden_size=hidden_size, n_actions=n_actions))

    # Reference 1: same math with the bf16-rounded params the kernel uses (tight check).
    w1q = w1.astype(jnp.bfloat16).astype(jnp.float32)
    b1q = b1.astype(jnp.bfloat16).astype(jnp.float32)
    w2q = w2.astype(jnp.bfloat16).astype(jnp.float32)
    b2q = b2.astype(jnp.bfloat16).astype(jnp.float32)
    ref_q = jax.nn.sigmoid(jnp.maximum(state @ w1q + b1q, 0.0) @ w2q + b2q)

    # Reference 2: the module's pure-f32 semantics (looser tolerance: differs only by
    # the bf16 rounding of the packed weights).
    ref = jax.nn.sigmoid(jnp.maximum(state @ w1 + b1, 0.0) @ w2 + b2)

    assert out.shape == (batch, n_actions)
    assert jnp.allclose(out, ref_q, atol=2e-3, rtol=2e-3)
    assert jnp.allclose(out, ref, atol=1e-2, rtol=1e-2)
    assert bool(jnp.all((out > 0.0) & (out < 1.0)))

    print("KERNEL_OK")
</pallas_src>

<mosaic_0001>
module attributes {stable_mosaic.version = 11 : i64} {
  func.func @_mlp_sigmoid_kernel(%arg0: i32, %arg1: memref<256x32xf32, #tpu.memory_space<vmem>>, %arg2: memref<33x128xbf16, #tpu.memory_space<vmem>>, %arg3: memref<129x128xbf16, #tpu.memory_space<vmem>>, %arg4: memref<256x4xf32, #tpu.memory_space<vmem>>) attributes {dimension_semantics = [#tpu.dimension_semantics<arbitrary>], iteration_bounds = array<i64: 1>, scalar_prefetch = 0 : i64, scratch_operands = 0 : i64, tpu.core_type = #tpu.core_type<tc>, window_params = [{transform_indices = @transform_0, window_bounds = array<i64: 256, 32>}, {pipeline_mode = #tpu.pipeline_mode<synchronous>, transform_indices = @transform_1, window_bounds = array<i64: 33, 128>}, {pipeline_mode = #tpu.pipeline_mode<synchronous>, transform_indices = @transform_2, window_bounds = array<i64: 129, 128>}, {transform_indices = @transform_3, window_bounds = array<i64: 256, 4>}]} {
    %c0 = arith.constant 0 : index
    %c0_0 = arith.constant 0 : index
    %0 = vector.load %arg1[%c0, %c0_0] : memref<256x32xf32, #tpu.memory_space<vmem>>, vector<256x32xf32>
    %c0_1 = arith.constant 0 : index
    %c0_2 = arith.constant 0 : index
    %1 = vector.load %arg2[%c0_1, %c0_2] : memref<33x128xbf16, #tpu.memory_space<vmem>>, vector<32x128xbf16>
    %c32 = arith.constant 32 : index
    %c0_3 = arith.constant 0 : index
    %2 = vector.load %arg2[%c32, %c0_3] : memref<33x128xbf16, #tpu.memory_space<vmem>>, vector<1x128xbf16>
    %cst = arith.constant dense<0.000000e+00> : vector<256x128xf32>
    %3 = tpu.matmul %0, %1, %cst {dimension_numbers = #tpu.dot_dimension_numbers<[1], [0], [0], [1], [0, 0, 1, 1], [], []>} : vector<256x32xf32>, vector<32x128xbf16>, vector<256x128xf32> -> vector<256x128xf32>
    %4 = arith.extf %2 : vector<1x128xbf16> to vector<1x128xf32>
    %5 = vector.broadcast %4 : vector<1x128xf32> to vector<256x128xf32>
    %6 = arith.addf %3, %5 : vector<256x128xf32>
    %cst_4 = arith.constant 0.000000e+00 : f32
    %7 = vector.broadcast %cst_4 : f32 to vector<256x128xf32>
    %8 = arith.maximumf %6, %7 : vector<256x128xf32>
    %c0_5 = arith.constant 0 : index
    %c0_6 = arith.constant 0 : index
    %9 = vector.load %arg3[%c0_5, %c0_6] : memref<129x128xbf16, #tpu.memory_space<vmem>>, vector<128x128xbf16>
    %c128 = arith.constant 128 : index
    %c0_7 = arith.constant 0 : index
    %10 = vector.load %arg3[%c128, %c0_7] : memref<129x128xbf16, #tpu.memory_space<vmem>>, vector<1x128xbf16>
    %cst_8 = arith.constant dense<0.000000e+00> : vector<256x128xf32>
    %11 = tpu.matmul %8, %9, %cst_8 {dimension_numbers = #tpu.dot_dimension_numbers<[1], [0], [0], [1], [0, 0, 1, 1], [], []>} : vector<256x128xf32>, vector<128x128xbf16>, vector<256x128xf32> -> vector<256x128xf32>
    %12 = arith.extf %10 : vector<1x128xbf16> to vector<1x128xf32>
    %13 = vector.broadcast %12 : vector<1x128xf32> to vector<256x128xf32>
    %14 = arith.addf %11, %13 : vector<256x128xf32>
    %15 = vector.extract_strided_slice %14 {offsets = [0, 0], sizes = [256, 4], strides = [1, 1]} : vector<256x128xf32> to vector<256x4xf32>
    %16 = math.absf %15 : vector<256x4xf32>
    %cst_9 = arith.constant 0.000000e+00 : f32
    %17 = vector.broadcast %cst_9 : f32 to vector<256x4xf32>
    %18 = arith.subf %17, %16 : vector<256x4xf32>
    %19 = math.exp %18 : vector<256x4xf32>
    %cst_10 = arith.constant 1.000000e+00 : f32
    %20 = vector.broadcast %cst_10 : f32 to vector<256x4xf32>
    %21 = arith.addf %20, %19 : vector<256x4xf32>
    %cst_11 = arith.constant 1.000000e+00 : f32
    %22 = vector.broadcast %cst_11 : f32 to vector<256x4xf32>
    %23 = arith.divf %22, %21 : vector<256x4xf32>
    %cst_12 = arith.constant 0.000000e+00 : f32
    %24 = vector.broadcast %cst_12 : f32 to vector<256x4xf32>
    %25 = arith.cmpf oge, %15, %24 : vector<256x4xf32>
    %cst_13 = arith.constant 1.000000e+00 : f32
    %26 = vector.broadcast %cst_13 : f32 to vector<256x4xf32>
    %27 = arith.subf %26, %23 : vector<256x4xf32>
    %28 = arith.select %25, %23, %27 : vector<256x4xi1>, vector<256x4xf32>
    %c0_14 = arith.constant 0 : index
    %c0_15 = arith.constant 0 : index
    %29 = vector.load %arg4[%c0_14, %c0_15] : memref<256x4xf32, #tpu.memory_space<vmem>>, vector<256x4xf32>
    tpu.vector_store %arg4[%c0_14, %c0_15], %28 {strides = array<i32>} : memref<256x4xf32, #tpu.memory_space<vmem>>, vector<256x4xf32>,
    return
  }
  func.func @transform_0(%arg0: i32) -> (i32, i32) {
    %c0_i32 = arith.constant 0 : i32
    %c0_i32_0 = arith.constant 0 : i32
    return %arg0, %c0_i32 : i32, i32
  }
  func.func @transform_1(%arg0: i32) -> (i32, i32) {
    %c0_i32 = arith.constant 0 : i32
    %c0_i32_0 = arith.constant 0 : i32
    %c0_i32_1 = arith.constant 0 : i32
    return %c0_i32, %c0_i32_0 : i32, i32
  }
  func.func @transform_2(%arg0: i32) -> (i32, i32) {
    %c0_i32 = arith.constant 0 : i32
    %c0_i32_0 = arith.constant 0 : i32
    %c0_i32_1 = arith.constant 0 : i32
    return %c0_i32, %c0_i32_0 : i32, i32
  }
  func.func @transform_3(%arg0: i32) -> (i32, i32) {
    %c0_i32 = arith.constant 0 : i32
    %c0_i32_0 = arith.constant 0 : i32
    return %arg0, %c0_i32 : i32, i32
  }
}

</mosaic_0001>

<llo_original>
// kernel: linear_r_deep_network_forward.1
$region0: #{linear_r_deep_network_forward.1}
  #allocation0 [shape = 'u32[]', space=smem, size = 0x4, offset = 0x4, fixed_abs, tag = 'smem constant byte address 0x4 - core index']
  #allocation1 [shape = 'u32[144,128]{1,0:T(1,128)}', space=vmem, size = 0x12000, scoped, tag = 'internal scratch']
  %s0 = inlined_call_operand.vmem [shape: f32[256,32], index: 0, kind: input, shape index: {}]
  %s1 = inlined_call_operand.vmem [shape: bf16[33,128], index: 1, kind: input, shape index: {}]
  %s2 = inlined_call_operand.vmem [shape: bf16[129,128], index: 2, kind: input, shape index: {}]
  %s3 = inlined_call_operand.vmem [shape: f32[256,4], index: 3, kind: output, shape index: {}]
  %s4 = sld [smem:[#allocation0]]
  $region22: #{linear_r_deep_network_forward.1} parent=0
    _
  %s6 = ssub.s32 1, %s4
  %s7 = scalar_select 0, %s6, %s4
  // Predicated region
  $region2: #{linear_r_deep_network_forward.1} parent=0 // pred_check
    _
  $region3: #{linear_r_deep_network_forward.1} parent=0 // pred_check_branch
    %9 = sbr.rel (0) target = $region5
  $region4: #{linear_r_deep_network_forward.1} parent=0 // pred_region
    _
  $region5: #{linear_r_deep_network_forward.1} parent=0 // pred_fallthru
    _
  // Predicated region
  $region6: #{linear_r_deep_network_forward.1} parent=0 // pred_check
    _
  $region7: #{linear_r_deep_network_forward.1} parent=0 // pred_check_branch
    %11 = sbr.rel (0) target = $region9
  $region8: #{linear_r_deep_network_forward.1} parent=0 // pred_region
    _
  $region9: #{linear_r_deep_network_forward.1} parent=0 // pred_fallthru
    _
  // Predicated region
  $region10: #{linear_r_deep_network_forward.1} parent=0 // pred_check
    _
  $region11: #{linear_r_deep_network_forward.1} parent=0 // pred_check_branch
    %13 = sbr.rel (0) target = $region13
  $region12: #{linear_r_deep_network_forward.1} parent=0 // pred_region
    _
  $region13: #{linear_r_deep_network_forward.1} parent=0 // pred_fallthru
    _
  %v15 = vld [vmem:[%s0] sm:$0xff]
  %v16 = vld [vmem:[%s0 + $0x8] sm:$0xff]
  %v17 = vld [vmem:[%s0 + $0x10] sm:$0xff]
  %v18 = vld [vmem:[%s0 + $0x18] sm:$0xff]
  %v19 = vld [vmem:[%s0 + $0x20] sm:$0xff]
  %v20 = vld [vmem:[%s0 + $0x28] sm:$0xff]
  %v21 = vld [vmem:[%s0 + $0x30] sm:$0xff]
  %v22 = vld [vmem:[%s0 + $0x38] sm:$0xff]
  %v23 = vld [vmem:[%s0 + $0x40] sm:$0xff]
  %v24 = vld [vmem:[%s0 + $0x48] sm:$0xff]
  %v25 = vld [vmem:[%s0 + $0x50] sm:$0xff]
  %v26 = vld [vmem:[%s0 + $0x58] sm:$0xff]
  %v27 = vld [vmem:[%s0 + $0x60] sm:$0xff]
  %v28 = vld [vmem:[%s0 + $0x68] sm:$0xff]
  %v29 = vld [vmem:[%s0 + $0x70] sm:$0xff]
  %v30 = vld [vmem:[%s0 + $0x78] sm:$0xff]
  %v31 = vld [vmem:[%s0 + $0x80] sm:$0xff]
  %v32 = vld [vmem:[%s0 + $0x88] sm:$0xff]
  %v33 = vld [vmem:[%s0 + $0x90] sm:$0xff]
  %v34 = vld [vmem:[%s0 + $0x98] sm:$0xff]
  %v35 = vld [vmem:[%s0 + $0xa0] sm:$0xff]
  %v36 = vld [vmem:[%s0 + $0xa8] sm:$0xff]
  %v37 = vld [vmem:[%s0 + $0xb0] sm:$0xff]
  %v38 = vld [vmem:[%s0 + $0xb8] sm:$0xff]
  %v39 = vld [vmem:[%s0 + $0xc0] sm:$0xff]
  %v40 = vld [vmem:[%s0 + $0xc8] sm:$0xff]
  %v41 = vld [vmem:[%s0 + $0xd0] sm:$0xff]
  %v42 = vld [vmem:[%s0 + $0xd8] sm:$0xff]
  %v43 = vld [vmem:[%s0 + $0xe0] sm:$0xff]
  %v44 = vld [vmem:[%s0 + $0xe8] sm:$0xff]
  %v45 = vld [vmem:[%s0 + $0xf0] sm:$0xff]
  %v46 = vld [vmem:[%s0 + $0xf8] sm:$0xff]
  %v47 = vld [vmem:[%s1] sm:$0xf]
  %v48 = vld [vmem:[%s1 + $0x4] sm:$0xf]
  %v49 = vld [vmem:[%s1 + $0x8] sm:$0xf]
  %v50 = vld [vmem:[%s1 + $0xc] sm:$0xf]
  %v51 = vld [vmem:[%s1 + $0x10] sm:$0x1]
  %v52 = vunpack.c.l.bf16 %v51
  %v53 = vlaneseq
  %v54 = vshrl.u32 %v53, 7
  %v55 = vsub.s32 0, %v54
  %v56 = vrot.slane %v52, %v55
  %v61 = vunpack.c.l.b16 %v47
  %v62 = vunpack.c.l.b16 %v48
  %v63 = vunpack.c.l.b16 %v49
  %v64 = vunpack.c.l.b16 %v50
  %v65 = vpack.c.b16 %v62, %v61
  %v66 = vpack.c.b16 %v64, %v63
  %vm69 = vcmask 261120
  %v71 = vsel %vm69, %v15, 0
  %v74 = vsel %vm69, %v16, 0
  %v77 = vsel %vm69, %v17, 0
  %v80 = vsel %vm69, %v18, 0
  %v83 = vsel %vm69, %v19, 0
  %v86 = vsel %vm69, %v20, 0
  %v89 = vsel %vm69, %v21, 0
  %v92 = vsel %vm69, %v22, 0
  %v95 = vsel %vm69, %v23, 0
  %v98 = vsel %vm69, %v24, 0
  %v101 = vsel %vm69, %v25, 0
  %v104 = vsel %vm69, %v26, 0
  %v107 = vsel %vm69, %v27, 0
  %v110 = vsel %vm69, %v28, 0
  %v113 = vsel %vm69, %v29, 0
  %v116 = vsel %vm69, %v30, 0
  %v119 = vsel %vm69, %v31, 0
  %v122 = vsel %vm69, %v32, 0
  %v125 = vsel %vm69, %v33, 0
  %v128 = vsel %vm69, %v34, 0
  %v131 = vsel %vm69, %v35, 0
  %v134 = vsel %vm69, %v36, 0
  %v137 = vsel %vm69, %v37, 0
  %v140 = vsel %vm69, %v38, 0
  %v143 = vsel %vm69, %v39, 0
  %v146 = vsel %vm69, %v40, 0
  %v149 = vsel %vm69, %v41, 0
  %v152 = vsel %vm69, %v42, 0
  %v155 = vsel %vm69, %v43, 0
  %v158 = vsel %vm69, %v44, 0
  %v161 = vsel %vm69, %v45, 0
  %v164 = vsel %vm69, %v46, 0
  %166 = vmatprep.subr.bf16.mxu0 0
  %167 = vmatpush1.bf16.msra.mxu0 %v65
  %168 = vmatprep.subr.bf16.mxu0 0
  %169 = vmatpush1.bf16.msra.mxu0 %v66
  %170 = vmatprep.subr.bf16.mxu0 0
  %171 = vmatpush1.bf16.msra.mxu0 0
  %172 = vmatprep.subr.bf16.mxu0 0
  %173 = vmatpush1.bf16.msra.mxu0 0
  %174 = vmatprep.subr.bf16.mxu0 0
  %175 = vmatpush1.bf16.msra.mxu0 0
  %176 = vmatprep.subr.bf16.mxu0 0
  %177 = vmatpush1.bf16.msra.mxu0 0
  %178 = vmatprep.subr.bf16.mxu0 0
  %179 = vmatpush1.bf16.msra.mxu0 0
  %180 = vmatprep.subr.bf16.mxu0 0
  %181 = vmatpush1.bf16.msra.mxu0 0
  %182 = vmatprep.subr.bf16.mxu0 0
  %183 = vmatpush1.bf16.msra.mxu0 0
  %184 = vmatprep.subr.bf16.mxu0 0
  %185 = vmatpush1.bf16.msra.mxu0 0
  %186 = vmatprep.subr.bf16.mxu0 0
  %187 = vmatpush1.bf16.msra.mxu0 0
  %188 = vmatprep.subr.bf16.mxu0 0
  %189 = vmatpush1.bf16.msra.mxu0 0
  %190 = vmatprep.subr.bf16.mxu0 0
  %191 = vmatpush1.bf16.msra.mxu0 0
  %192 = vmatprep.subr.bf16.mxu0 0
  %193 = vmatpush1.bf16.msra.mxu0 0
  %194 = vmatprep.subr.bf16.mxu0 0
  %195 = vmatpush1.bf16.msra.mxu0 0
  %196 = vmatprep.subr.bf16.mxu0 0
  %197 = vmatpush1.bf16.msra.mxu0 0
  %198 = vmatprep.mubr.f32.mxu0 0.0
  %199 = vmatmul.mubr.f32.gmra.mrb[0].mxu0 %v71
  %v200 = vpop.f32.mrb[0].mxu0
  %v201 = vadd.f32 %v56, %v200
  %v202 = vpop.f32.mrb[0].mxu0
  %203 = vmatprep.mubr.f32.mxu0 0.0
  %204 = vmatmul.mubr.f32.gmra.mrb[0].mxu0 %v74
  %v205 = vpop.f32.mrb[0].mxu0
  %v206 = vadd.f32 %v56, %v205
  %v207 = vpop.f32.mrb[0].mxu0
  %208 = vmatprep.mubr.f32.mxu0 0.0
  %209 = vmatmul.mubr.f32.gmra.mrb[0].mxu0 %v77
  %v210 = vpop.f32.mrb[0].mxu0
  %v211 = vadd.f32 %v56, %v210
  %v212 = vpop.f32.mrb[0].mxu0
  %213 = vmatprep.mubr.f32.mxu0 0.0
  %214 = vmatmul.mubr.f32.gmra.mrb[0].mxu0 %v80
  %v215 = vpop.f32.mrb[0].mxu0
  %v216 = vadd.f32 %v56, %v215
  %v217 = vpop.f32.mrb[0].mxu0
  %218 = vmatprep.mubr.f32.mxu0 0.0
  %219 = vmatmul.mubr.f32.gmra.mrb[0].mxu0 %v83
  %v220 = vpop.f32.mrb[0].mxu0
  %v221 = vadd.f32 %v56, %v220
  %v222 = vpop.f32.mrb[0].mxu0
  %223 = vmatprep.mubr.f32.mxu0 0.0
  %224 = vmatmul.mubr.f32.gmra.mrb[0].mxu0 %v86
  %v225 = vpop.f32.mrb[0].mxu0
  %v226 = vadd.f32 %v56, %v225
  %v227 = vpop.f32.mrb[0].mxu0
  %228 = vmatprep.mubr.f32.mxu0 0.0
  %229 = vmatmul.mubr.f32.gmra.mrb[0].mxu0 %v89
  %v230 = vpop.f32.mrb[0].mxu0
  %v231 = vadd.f32 %v56, %v230
  %v232 = vpop.f32.mrb[0].mxu0
  %233 = vmatprep.mubr.f32.mxu0 0.0
  %234 = vmatmul.mubr.f32.gmra.mrb[0].mxu0 %v92
  %v235 = vpop.f32.mrb[0].mxu0
  %v236 = vadd.f32 %v56, %v235
  %v237 = vpop.f32.mrb[0].mxu0
  %238 = vmatprep.mubr.f32.mxu0 0.0
  %239 = vmatmul.mubr.f32.gmra.mrb[0].mxu0 %v95
  %v240 = vpop.f32.mrb[0].mxu0
  %v241 = vadd.f32 %v56, %v240
  %v242 = vpop.f32.mrb[0].mxu0
  %243 = vmatprep.mubr.f32.mxu0 0.0
  %244 = vmatmul.mubr.f32.gmra.mrb[0].mxu0 %v98
  %v245 = vpop.f32.mrb[0].mxu0
  %v246 = vadd.f32 %v56, %v245
  %v247 = vpop.f32.mrb[0].mxu0
  %248 = vmatprep.mubr.f32.mxu0 0.0
  %249 = vmatmul.mubr.f32.gmra.mrb[0].mxu0 %v101
  %v250 = vpop.f32.mrb[0].mxu0
  %v251 = vadd.f32 %v56, %v250
  %v252 = vpop.f32.mrb[0].mxu0
  %253 = vmatprep.mubr.f32.mxu0 0.0
  %254 = vmatmul.mubr.f32.gmra.mrb[0].mxu0 %v104
  %v255 = vpop.f32.mrb[0].mxu0
  %v256 = vadd.f32 %v56, %v255
  %v257 = vpop.f32.mrb[0].mxu0
  %258 = vmatprep.mubr.f32.mxu0 0.0
  %259 = vmatmul.mubr.f32.gmra.mrb[0].mxu0 %v107
  %v260 = vpop.f32.mrb[0].mxu0
  %v261 = vadd.f32 %v56, %v260
  %v262 = vpop.f32.mrb[0].mxu0
  %263 = vmatprep.mubr.f32.mxu0 0.0
  %264 = vmatmul.mubr.f32.gmra.mrb[0].mxu0 %v110
  %v265 = vpop.f32.mrb[0].mxu0
  %v266 = vadd.f32 %v56, %v265
  %v267 = vpop.f32.mrb[0].mxu0
  %268 = vmatprep.mubr.f32.mxu0 0.0
  %269 = vmatmul.mubr.f32.gmra.mrb[0].mxu0 %v113
  %v270 = vpop.f32.mrb[0].mxu0
  %v271 = vadd.f32 %v56, %v270
  %v272 = vpop.f32.mrb[0].mxu0
  %273 = vmatprep.mubr.f32.mxu0 0.0
  %274 = vmatmul.mubr.f32.gmra.mrb[0].mxu0 %v116
  %v275 = vpop.f32.mrb[0].mxu0
  %v276 = vadd.f32 %v56, %v275
  %v277 = vpop.f32.mrb[0].mxu0
  %278 = vmatprep.mubr.f32.mxu0 0.0
  %279 = vmatmul.mubr.f32.gmra.mrb[0].mxu0 %v119
  %v280 = vpop.f32.mrb[0].mxu0
  %v281 = vadd.f32 %v56, %v280
  %v282 = vpop.f32.mrb[0].mxu0
  %283 = vmatprep.mubr.f32.mxu0 0.0
  %284 = vmatmul.mubr.f32.gmra.mrb[0].mxu0 %v122
  %v285 = vpop.f32.mrb[0].mxu0
  %v286 = vadd.f32 %v56, %v285
  %v287 = vpop.f32.mrb[0].mxu0
  %288 = vmatprep.mubr.f32.mxu0 0.0
  %289 = vmatmul.mubr.f32.gmra.mrb[0].mxu0 %v125
  %v290 = vpop.f32.mrb[0].mxu0
  %v291 = vadd.f32 %v56, %v290
  %v292 = vpop.f32.mrb[0].mxu0
  %293 = vmatprep.mubr.f32.mxu0 0.0
  %294 = vmatmul.mubr.f32.gmra.mrb[0].mxu0 %v128
  %v295 = vpop.f32.mrb[0].mxu0
  %v296 = vadd.f32 %v56, %v295
  %v297 = vpop.f32.mrb[0].mxu0
  %298 = vmatprep.mubr.f32.mxu0 0.0
  %299 = vmatmul.mubr.f32.gmra.mrb[0].mxu0 %v131
  %v300 = vpop.f32.mrb[0].mxu0
  %v301 = vadd.f32 %v56, %v300
  %v302 = vpop.f32.mrb[0].mxu0
  %303 = vmatprep.mubr.f32.mxu0 0.0
  %304 = vmatmul.mubr.f32.gmra.mrb[0].mxu0 %v134
  %v305 = vpop.f32.mrb[0].mxu0
  %v306 = vadd.f32 %v56, %v305
  %v307 = vpop.f32.mrb[0].mxu0
  %308 = vmatprep.mubr.f32.mxu0 0.0
  %309 = vmatmul.mubr.f32.gmra.mrb[0].mxu0 %v137
  %v310 = vpop.f32.mrb[0].mxu0
  %v311 = vadd.f32 %v56, %v310
  %v312 = vpop.f32.mrb[0].mxu0
  %313 = vmatprep.mubr.f32.mxu0 0.0
  %314 = vmatmul.mubr.f32.gmra.mrb[0].mxu0 %v140
  %v315 = vpop.f32.mrb[0].mxu0
  %v316 = vadd.f32 %v56, %v315
  %v317 = vpop.f32.mrb[0].mxu0
  %318 = vmatprep.mubr.f32.mxu0 0.0
  %319 = vmatmul.mubr.f32.gmra.mrb[0].mxu0 %v143
  %v320 = vpop.f32.mrb[0].mxu0
  %v321 = vadd.f32 %v56, %v320
  %v322 = vpop.f32.mrb[0].mxu0
  %323 = vmatprep.mubr.f32.mxu0 0.0
  %324 = vmatmul.mubr.f32.gmra.mrb[0].mxu0 %v146
  %v325 = vpop.f32.mrb[0].mxu0
  %v326 = vadd.f32 %v56, %v325
  %v327 = vpop.f32.mrb[0].mxu0
  %328 = vmatprep.mubr.f32.mxu0 0.0
  %329 = vmatmul.mubr.f32.gmra.mrb[0].mxu0 %v149
  %v330 = vpop.f32.mrb[0].mxu0
  %v331 = vadd.f32 %v56, %v330
  %v332 = vpop.f32.mrb[0].mxu0
  %333 = vmatprep.mubr.f32.mxu0 0.0
  %334 = vmatmul.mubr.f32.gmra.mrb[0].mxu0 %v152
  %v335 = vpop.f32.mrb[0].mxu0
  %v336 = vadd.f32 %v56, %v335
  %v337 = vpop.f32.mrb[0].mxu0
  %338 = vmatprep.mubr.f32.mxu0 0.0
  %339 = vmatmul.mubr.f32.gmra.mrb[0].mxu0 %v155
  %v340 = vpop.f32.mrb[0].mxu0
  %v341 = vadd.f32 %v56, %v340
  %v342 = vpop.f32.mrb[0].mxu0
  %343 = vmatprep.mubr.f32.mxu0 0.0
  %344 = vmatmul.mubr.f32.gmra.mrb[0].mxu0 %v158
  %v345 = vpop.f32.mrb[0].mxu0
  %v346 = vadd.f32 %v56, %v345
  %v347 = vpop.f32.mrb[0].mxu0
  %348 = vmatprep.mubr.f32.mxu0 0.0
  %349 = vmatmul.mubr.f32.gmra.mrb[0].mxu0 %v161
  %v350 = vpop.f32.mrb[0].mxu0
  %v351 = vadd.f32 %v56, %v350
  %v352 = vpop.f32.mrb[0].mxu0
  %353 = vmatprep.mubr.f32.mxu0 0.0
  %354 = vmatmul.mubr.f32.gmra.mrb[0].mxu0 %v164
  %v355 = vpop.f32.mrb[0].mxu0
  %v356 = vadd.f32 %v56, %v355
  %v357 = vpop.f32.mrb[0].mxu0
  %358 = vdwg.mxu0
  %v359 = vmax.f32 %v201, 0.0
  %v360 = vmax.f32 %v206, 0.0
  %v361 = vmax.f32 %v211, 0.0
  %v362 = vmax.f32 %v216, 0.0
  %v363 = vmax.f32 %v221, 0.0
  %v364 = vmax.f32 %v226, 0.0
  %v365 = vmax.f32 %v231, 0.0
  %v366 = vmax.f32 %v236, 0.0
  %v367 = vmax.f32 %v241, 0.0
  %v368 = vmax.f32 %v246, 0.0
  %v369 = vmax.f32 %v251, 0.0
  %v370 = vmax.f32 %v256, 0.0
  %v371 = vmax.f32 %v261, 0.0
  %v372 = vmax.f32 %v266, 0.0
  %v373 = vmax.f32 %v271, 0.0
  %v374 = vmax.f32 %v276, 0.0
  %v375 = vmax.f32 %v281, 0.0
  %v376 = vmax.f32 %v286, 0.0
  %v377 = vmax.f32 %v291, 0.0
  %v378 = vmax.f32 %v296, 0.0
  %v379 = vmax.f32 %v301, 0.0
  %v380 = vmax.f32 %v306, 0.0
  %v381 = vmax.f32 %v311, 0.0
  %v382 = vmax.f32 %v316, 0.0
  %v383 = vmax.f32 %v321, 0.0
  %v384 = vmax.f32 %v326, 0.0
  %v385 = vmax.f32 %v331, 0.0
  %v386 = vmax.f32 %v336, 0.0
  %v387 = vmax.f32 %v341, 0.0
  %v388 = vmax.f32 %v346, 0.0
  %v389 = vmax.f32 %v351, 0.0
  %v390 = vmax.f32 %v356, 0.0
  %v391 = vld [vmem:[%s2] sm:$0xf]
  %v392 = vld [vmem:[%s2 + $0x4] sm:$0xf]
  %v393 = vld [vmem:[%s2 + $0x8] sm:$0xf]
  %v394 = vld [vmem:[%s2 + $0xc] sm:$0xf]
  %v395 = vld [vmem:[%s2 + $0x10] sm:$0xf]
  %v396 = vld [vmem:[%s2 + $0x14] sm:$0xf]
  %v397 = vld [vmem:[%s2 + $0x18] sm:$0xf]
  %v398 = vld [vmem:[%s2 + $0x1c] sm:$0xf]
  %v399 = vld [vmem:[%s2 + $0x20] sm:$0xf]
  %v400 = vld [vmem:[%s2 + $0x24] sm:$0xf]
  %v401 = vld [vmem:[%s2 + $0x28] sm:$0xf]
  %v402 = vld [vmem:[%s2 + $0x2c] sm:$0xf]
  %v403 = vld [vmem:[%s2 + $0x30] sm:$0xf]
  %v404 = vld [vmem:[%s2 + $0x34] sm:$0xf]
  %v405 = vld [vmem:[%s2 + $0x38] sm:$0xf]
  %v406 = vld [vmem:[%s2 + $0x3c] sm:$0xf]
  %v407 = vld [vmem:[%s2 + $0x40] sm:$0x1]
  %v408 = vunpack.c.l.bf16 %v407
  %v409 = vlaneseq
  %v410 = vshrl.u32 %v409, 7
  %v411 = vsub.s32 0, %v410
  %v412 = vrot.slane %v408, %v411
  %v429 = vunpack.c.l.b16 %v391
  %v430 = vunpack.c.l.b16 %v392
  %v431 = vunpack.c.l.b16 %v393
  %v432 = vunpack.c.l.b16 %v394
  %v433 = vunpack.c.l.b16 %v395
  %v434 = vunpack.c.l.b16 %v396
  %v435 = vunpack.c.l.b16 %v397
  %v436 = vunpack.c.l.b16 %v398
  %v437 = vunpack.c.l.b16 %v399
  %v438 = vunpack.c.l.b16 %v400
  %v439 = vunpack.c.l.b16 %v401
  %v440 = vunpack.c.l.b16 %v402
  %v441 = vunpack.c.l.b16 %v403
  %v442 = vunpack.c.l.b16 %v404
  %v443 = vunpack.c.l.b16 %v405
  %v444 = vunpack.c.l.b16 %v406
  %v445 = vpack.c.b16 %v430, %v429
  %v446 = vpack.c.b16 %v432, %v431
  %v447 = vpack.c.b16 %v434, %v433
  %v448 = vpack.c.b16 %v436, %v435
  %v449 = vpack.c.b16 %v438, %v437
  %v450 = vpack.c.b16 %v440, %v439
  %v451 = vpack.c.b16 %v442, %v441
  %v452 = vpack.c.b16 %v444, %v443
  %461 = vmatprep.subr.bf16.mxu0 0
  %462 = vmatpush1.bf16.msra.mxu0 %v445
  %463 = vmatprep.subr.bf16.mxu0 0
  %464 = vmatpush1.bf16.msra.mxu0 %v446
  %465 = vmatprep.subr.bf16.mxu0 0
  %466 = vmatpush1.bf16.msra.mxu0 %v447
  %467 = vmatprep.subr.bf16.mxu0 0
  %468 = vmatpush1.bf16.msra.mxu0 %v448
  %469 = vmatprep.subr.bf16.mxu0 0
  %470 = vmatpush1.bf16.msra.mxu0 %v449
  %471 = vmatprep.subr.bf16.mxu0 0
  %472 = vmatpush1.bf16.msra.mxu0 %v450
  %473 = vmatprep.subr.bf16.mxu0 0
  %474 = vmatpush1.bf16.msra.mxu0 %v451
  %475 = vmatprep.subr.bf16.mxu0 0
  %476 = vmatpush1.bf16.msra.mxu0 %v452
  %477 = vmatprep.subr.bf16.mxu0 0
  %478 = vmatpush1.bf16.msra.mxu0 0
  %479 = vmatprep.subr.bf16.mxu0 0
  %480 = vmatpush1.bf16.msra.mxu0 0
  %481 = vmatprep.subr.bf16.mxu0 0
  %482 = vmatpush1.bf16.msra.mxu0 0
  %483 = vmatprep.subr.bf16.mxu0 0
  %484 = vmatpush1.bf16.msra.mxu0 0
  %485 = vmatprep.subr.bf16.mxu0 0
  %486 = vmatpush1.bf16.msra.mxu0 0
  %487 = vmatprep.subr.bf16.mxu0 0
  %488 = vmatpush1.bf16.msra.mxu0 0
  %489 = vmatprep.subr.bf16.mxu0 0
  %490 = vmatpush1.bf16.msra.mxu0 0
  %491 = vmatprep.subr.bf16.mxu0 0
  %492 = vmatpush1.bf16.msra.mxu0 0
  %493 = vmatprep.mubr.f32.mxu0 0.0
  %494 = vmatmul.mubr.f32.gmra.mrb[0].mxu0 %v359
  %v495 = vpop.f32.mrb[0].mxu0
  %v496 = vadd.f32 %v412, %v495
  %v497 = vpop.f32.mrb[0].mxu0
  %498 = vmatprep.mubr.f32.mxu0 0.0
  %499 = vmatmul.mubr.f32.gmra.mrb[0].mxu0 %v360
  %v500 = vpop.f32.mrb[0].mxu0
  %v501 = vadd.f32 %v412, %v500
  %v502 = vpop.f32.mrb[0].mxu0
  %503 = vmatprep.mubr.f32.mxu0 0.0
  %504 = vmatmul.mubr.f32.gmra.mrb[0].mxu0 %v361
  %v505 = vpop.f32.mrb[0].mxu0
  %v506 = vadd.f32 %v412, %v505
  %v507 = vpop.f32.mrb[0].mxu0
  %508 = vmatprep.mubr.f32.mxu0 0.0
  %509 = vmatmul.mubr.f32.gmra.mrb[0].mxu0 %v362
  %v510 = vpop.f32.mrb[0].mxu0
  %v511 = vadd.f32 %v412, %v510
  %v512 = vpop.f32.mrb[0].mxu0
  %513 = vmatprep.mubr.f32.mxu0 0.0
  %514 = vmatmul.mubr.f32.gmra.mrb[0].mxu0 %v363
  %v515 = vpop.f32.mrb[0].mxu0
  %v516 = vadd.f32 %v412, %v515
  %v517 = vpop.f32.mrb[0].mxu0
  %518 = vmatprep.mubr.f32.mxu0 0.0
  %519 = vmatmul.mubr.f32.gmra.mrb[0].mxu0 %v364
  %v520 = vpop.f32.mrb[0].mxu0
  %v521 = vadd.f32 %v412, %v520
  %v522 = vpop.f32.mrb[0].mxu0
  %523 = vmatprep.mubr.f32.mxu0 0.0
  %524 = vmatmul.mubr.f32.gmra.mrb[0].mxu0 %v365
  %v525 = vpop.f32.mrb[0].mxu0
  %v526 = vadd.f32 %v412, %v525
  %v527 = vpop.f32.mrb[0].mxu0
  %528 = vmatprep.mubr.f32.mxu0 0.0
  %529 = vmatmul.mubr.f32.gmra.mrb[0].mxu0 %v366
  %v530 = vpop.f32.mrb[0].mxu0
  %v531 = vadd.f32 %v412, %v530
  %v532 = vpop.f32.mrb[0].mxu0
  %533 = vmatprep.mubr.f32.mxu0 0.0
  %534 = vmatmul.mubr.f32.gmra.mrb[0].mxu0 %v367
  %v535 = vpop.f32.mrb[0].mxu0
  %v536 = vadd.f32 %v412, %v535
  %v537 = vpop.f32.mrb[0].mxu0
  %538 = vmatprep.mubr.f32.mxu0 0.0
  %539 = vmatmul.mubr.f32.gmra.mrb[0].mxu0 %v368
  %v540 = vpop.f32.mrb[0].mxu0
  %v541 = vadd.f32 %v412, %v540
  %v542 = vpop.f32.mrb[0].mxu0
  %543 = vmatprep.mubr.f32.mxu0 0.0
  %544 = vmatmul.mubr.f32.gmra.mrb[0].mxu0 %v369
  %v545 = vpop.f32.mrb[0].mxu0
  %v546 = vadd.f32 %v412, %v545
  %v547 = vpop.f32.mrb[0].mxu0
  %548 = vmatprep.mubr.f32.mxu0 0.0
  %549 = vmatmul.mubr.f32.gmra.mrb[0].mxu0 %v370
  %v550 = vpop.f32.mrb[0].mxu0
  %v551 = vadd.f32 %v412, %v550
  %v552 = vpop.f32.mrb[0].mxu0
  %553 = vmatprep.mubr.f32.mxu0 0.0
  %554 = vmatmul.mubr.f32.gmra.mrb[0].mxu0 %v371
  %v555 = vpop.f32.mrb[0].mxu0
  %v556 = vadd.f32 %v412, %v555
  %v557 = vpop.f32.mrb[0].mxu0
  %558 = vmatprep.mubr.f32.mxu0 0.0
  %559 = vmatmul.mubr.f32.gmra.mrb[0].mxu0 %v372
  %v560 = vpop.f32.mrb[0].mxu0
  %v561 = vadd.f32 %v412, %v560
  %v562 = vpop.f32.mrb[0].mxu0
  %563 = vmatprep.mubr.f32.mxu0 0.0
  %564 = vmatmul.mubr.f32.gmra.mrb[0].mxu0 %v373
  %v565 = vpop.f32.mrb[0].mxu0
  %v566 = vadd.f32 %v412, %v565
  %v567 = vpop.f32.mrb[0].mxu0
  %568 = vmatprep.mubr.f32.mxu0 0.0
  %569 = vmatmul.mubr.f32.gmra.mrb[0].mxu0 %v374
  %v570 = vpop.f32.mrb[0].mxu0
  %v571 = vadd.f32 %v412, %v570
  %v572 = vpop.f32.mrb[0].mxu0
  %573 = vmatprep.mubr.f32.mxu0 0.0
  %574 = vmatmul.mubr.f32.gmra.mrb[0].mxu0 %v375
  %v575 = vpop.f32.mrb[0].mxu0
  %v576 = vadd.f32 %v412, %v575
  %v577 = vpop.f32.mrb[0].mxu0
  %578 = vmatprep.mubr.f32.mxu0 0.0
  %579 = vmatmul.mubr.f32.gmra.mrb[0].mxu0 %v376
  %v580 = vpop.f32.mrb[0].mxu0
  %v581 = vadd.f32 %v412, %v580
  %v582 = vpop.f32.mrb[0].mxu0
  %583 = vmatprep.mubr.f32.mxu0 0.0
  %584 = vmatmul.mubr.f32.gmra.mrb[0].mxu0 %v377
  %v585 = vpop.f32.mrb[0].mxu0
  %v586 = vadd.f32 %v412, %v585
  %v587 = vpop.f32.mrb[0].mxu0
  %588 = vmatprep.mubr.f32.mxu0 0.0
  %589 = vmatmul.mubr.f32.gmra.mrb[0].mxu0 %v378
  %v590 = vpop.f32.mrb[0].mxu0
  %v591 = vadd.f32 %v412, %v590
  %v592 = vpop.f32.mrb[0].mxu0
  %593 = vmatprep.mubr.f32.mxu0 0.0
  %594 = vmatmul.mubr.f32.gmra.mrb[0].mxu0 %v379
  %v595 = vpop.f32.mrb[0].mxu0
  %v596 = vadd.f32 %v412, %v595
  %v597 = vpop.f32.mrb[0].mxu0
  %598 = vmatprep.mubr.f32.mxu0 0.0
  %599 = vmatmul.mubr.f32.gmra.mrb[0].mxu0 %v380
  %v600 = vpop.f32.mrb[0].mxu0
  %v601 = vadd.f32 %v412, %v600
  %v602 = vpop.f32.mrb[0].mxu0
  %603 = vmatprep.mubr.f32.mxu0 0.0
  %604 = vmatmul.mubr.f32.gmra.mrb[0].mxu0 %v381
  %v605 = vpop.f32.mrb[0].mxu0
  %v606 = vadd.f32 %v412, %v605
  %v607 = vpop.f32.mrb[0].mxu0
  %608 = vmatprep.mubr.f32.mxu0 0.0
  %609 = vmatmul.mubr.f32.gmra.mrb[0].mxu0 %v382
  %v610 = vpop.f32.mrb[0].mxu0
  %v611 = vadd.f32 %v412, %v610
  %v612 = vpop.f32.mrb[0].mxu0
  %613 = vmatprep.mubr.f32.mxu0 0.0
  %614 = vmatmul.mubr.f32.gmra.mrb[0].mxu0 %v383
  %v615 = vpop.f32.mrb[0].mxu0
  %v616 = vadd.f32 %v412, %v615
  %v617 = vpop.f32.mrb[0].mxu0
  %618 = vmatprep.mubr.f32.mxu0 0.0
  %619 = vmatmul.mubr.f32.gmra.mrb[0].mxu0 %v384
  %v620 = vpop.f32.mrb[0].mxu0
  %v621 = vadd.f32 %v412, %v620
  %v622 = vpop.f32.mrb[0].mxu0
  %623 = vmatprep.mubr.f32.mxu0 0.0
  %624 = vmatmul.mubr.f32.gmra.mrb[0].mxu0 %v385
  %v625 = vpop.f32.mrb[0].mxu0
  %v626 = vadd.f32 %v412, %v625
  %v627 = vpop.f32.mrb[0].mxu0
  %628 = vmatprep.mubr.f32.mxu0 0.0
  %629 = vmatmul.mubr.f32.gmra.mrb[0].mxu0 %v386
  %v630 = vpop.f32.mrb[0].mxu0
  %v631 = vadd.f32 %v412, %v630
  %v632 = vpop.f32.mrb[0].mxu0
  %633 = vmatprep.mubr.f32.mxu0 0.0
  %634 = vmatmul.mubr.f32.gmra.mrb[0].mxu0 %v387
  %v635 = vpop.f32.mrb[0].mxu0
  %v636 = vadd.f32 %v412, %v635
  %v637 = vpop.f32.mrb[0].mxu0
  %638 = vmatprep.mubr.f32.mxu0 0.0
  %639 = vmatmul.mubr.f32.gmra.mrb[0].mxu0 %v388
  %v640 = vpop.f32.mrb[0].mxu0
  %v641 = vadd.f32 %v412, %v640
  %v642 = vpop.f32.mrb[0].mxu0
  %643 = vmatprep.mubr.f32.mxu0 0.0
  %644 = vmatmul.mubr.f32.gmra.mrb[0].mxu0 %v389
  %v645 = vpop.f32.mrb[0].mxu0
  %v646 = vadd.f32 %v412, %v645
  %v647 = vpop.f32.mrb[0].mxu0
  %648 = vmatprep.mubr.f32.mxu0 0.0
  %649 = vmatmul.mubr.f32.gmra.mrb[0].mxu0 %v390
  %v650 = vpop.f32.mrb[0].mxu0
  %v651 = vadd.f32 %v412, %v650
  %v652 = vpop.f32.mrb[0].mxu0
  %653 = vdwg.mxu0
  %v654 = vand.u32 2147483647, %v496
  %v655 = vand.u32 2147483647, %v501
  %v656 = vand.u32 2147483647, %v506
  %v657 = vand.u32 2147483647, %v511
  %v658 = vand.u32 2147483647, %v516
  %v659 = vand.u32 2147483647, %v521
  %v660 = vand.u32 2147483647, %v526
  %v661 = vand.u32 2147483647, %v531
  %v662 = vand.u32 2147483647, %v536
  %v663 = vand.u32 2147483647, %v541
  %v664 = vand.u32 2147483647, %v546
  %v665 = vand.u32 2147483647, %v551
  %v666 = vand.u32 2147483647, %v556
  %v667 = vand.u32 2147483647, %v561
  %v668 = vand.u32 2147483647, %v566
  %v669 = vand.u32 2147483647, %v571
  %v670 = vand.u32 2147483647, %v576
  %v671 = vand.u32 2147483647, %v581
  %v672 = vand.u32 2147483647, %v586
  %v673 = vand.u32 2147483647, %v591
  %v674 = vand.u32 2147483647, %v596
  %v675 = vand.u32 2147483647, %v601
  %v676 = vand.u32 2147483647, %v606
  %v677 = vand.u32 2147483647, %v611
  %v678 = vand.u32 2147483647, %v616
  %v679 = vand.u32 2147483647, %v621
  %v680 = vand.u32 2147483647, %v626
  %v681 = vand.u32 2147483647, %v631
  %v682 = vand.u32 2147483647, %v636
  %v683 = vand.u32 2147483647, %v641
  %v684 = vand.u32 2147483647, %v646
  %v685 = vand.u32 2147483647, %v651
  %v686 = vsub.f32 0.0, %v654
  %v687 = vsub.f32 0.0, %v655
  %v688 = vsub.f32 0.0, %v656
  %v689 = vsub.f32 0.0, %v657
  %v690 = vsub.f32 0.0, %v658
  %v691 = vsub.f32 0.0, %v659
  %v692 = vsub.f32 0.0, %v660
  %v693 = vsub.f32 0.0, %v661
  %v694 = vsub.f32 0.0, %v662
  %v695 = vsub.f32 0.0, %v663
  %v696 = vsub.f32 0.0, %v664
  %v697 = vsub.f32 0.0, %v665
  %v698 = vsub.f32 0.0, %v666
  %v699 = vsub.f32 0.0, %v667
  %v700 = vsub.f32 0.0, %v668
  %v701 = vsub.f32 0.0, %v669
  %v702 = vsub.f32 0.0, %v670
  %v703 = vsub.f32 0.0, %v671
  %v704 = vsub.f32 0.0, %v672
  %v705 = vsub.f32 0.0, %v673
  %v706 = vsub.f32 0.0, %v674
  %v707 = vsub.f32 0.0, %v675
  %v708 = vsub.f32 0.0, %v676
  %v709 = vsub.f32 0.0, %v677
  %v710 = vsub.f32 0.0, %v678
  %v711 = vsub.f32 0.0, %v679
  %v712 = vsub.f32 0.0, %v680
  %v713 = vsub.f32 0.0, %v681
  %v714 = vsub.f32 0.0, %v682
  %v715 = vsub.f32 0.0, %v683
  %v716 = vsub.f32 0.0, %v684
  %v717 = vsub.f32 0.0, %v685
  %v718 = vmul.f32 %v686, 1.442695
  %v719 = vpow.pop %v718
  %v720 = vmul.f32 %v687, 1.442695
  %v721 = vpow.pop %v720
  %v722 = vmul.f32 %v688, 1.442695
  %v723 = vpow.pop %v722
  %v724 = vmul.f32 %v689, 1.442695
  %v725 = vpow.pop %v724
  %v726 = vmul.f32 %v690, 1.442695
  %v727 = vpow.pop %v726
  %v728 = vmul.f32 %v691, 1.442695
  %v729 = vpow.pop %v728
  %v730 = vmul.f32 %v692, 1.442695
  %v731 = vpow.pop %v730
  %v732 = vmul.f32 %v693, 1.442695
  %v733 = vpow.pop %v732
  %v734 = vmul.f32 %v694, 1.442695
  %v735 = vpow.pop %v734
  %v736 = vmul.f32 %v695, 1.442695
  %v737 = vpow.pop %v736
  %v738 = vmul.f32 %v696, 1.442695
  %v739 = vpow.pop %v738
  %v740 = vmul.f32 %v697, 1.442695
  %v741 = vpow.pop %v740
  %v742 = vmul.f32 %v698, 1.442695
  %v743 = vpow.pop %v742
  %v744 = vmul.f32 %v699, 1.442695
  %v745 = vpow.pop %v744
  %v746 = vmul.f32 %v700, 1.442695
  %v747 = vpow.pop %v746
  %v748 = vmul.f32 %v701, 1.442695
  %v749 = vpow.pop %v748
  %v750 = vmul.f32 %v702, 1.442695
  %v751 = vpow.pop %v750
  %v752 = vmul.f32 %v703, 1.442695
  %v753 = vpow.pop %v752
  %v754 = vmul.f32 %v704, 1.442695
  %v755 = vpow.pop %v754
  %v756 = vmul.f32 %v705, 1.442695
  %v757 = vpow.pop %v756
  %v758 = vmul.f32 %v706, 1.442695
  %v759 = vpow.pop %v758
  %v760 = vmul.f32 %v707, 1.442695
  %v761 = vpow.pop %v760
  %v762 = vmul.f32 %v708, 1.442695
  %v763 = vpow.pop %v762
  %v764 = vmul.f32 %v709, 1.442695
  %v765 = vpow.pop %v764
  %v766 = vmul.f32 %v710, 1.442695
  %v767 = vpow.pop %v766
  %v768 = vmul.f32 %v711, 1.442695
  %v769 = vpow.pop %v768
  %v770 = vmul.f32 %v712, 1.442695
  %v771 = vpow.pop %v770
  %v772 = vmul.f32 %v713, 1.442695
  %v773 = vpow.pop %v772
  %v774 = vmul.f32 %v714, 1.442695
  %v775 = vpow.pop %v774
  %v776 = vmul.f32 %v715, 1.442695
  %v777 = vpow.pop %v776
  %v778 = vmul.f32 %v716, 1.442695
  %v779 = vpow.pop %v778
  %v780 = vmul.f32 %v717, 1.442695
  %v781 = vpow.pop %v780
  %v782 = vadd.f32 %v719, 1.0
  %v783 = vadd.f32 %v721, 1.0
  %v784 = vadd.f32 %v723, 1.0
  %v785 = vadd.f32 %v725, 1.0
  %v786 = vadd.f32 %v727, 1.0
  %v787 = vadd.f32 %v729, 1.0
  %v788 = vadd.f32 %v731, 1.0
  %v789 = vadd.f32 %v733, 1.0
  %v790 = vadd.f32 %v735, 1.0
  %v791 = vadd.f32 %v737, 1.0
  %v792 = vadd.f32 %v739, 1.0
  %v793 = vadd.f32 %v741, 1.0
  %v794 = vadd.f32 %v743, 1.0
  %v795 = vadd.f32 %v745, 1.0
  %v796 = vadd.f32 %v747, 1.0
  %v797 = vadd.f32 %v749, 1.0
  %v798 = vadd.f32 %v751, 1.0
  %v799 = vadd.f32 %v753, 1.0
  %v800 = vadd.f32 %v755, 1.0
  %v801 = vadd.f32 %v757, 1.0
  %v802 = vadd.f32 %v759, 1.0
  %v803 = vadd.f32 %v761, 1.0
  %v804 = vadd.f32 %v763, 1.0
  %v805 = vadd.f32 %v765, 1.0
  %v806 = vadd.f32 %v767, 1.0
  %v807 = vadd.f32 %v769, 1.0
  %v808 = vadd.f32 %v771, 1.0
  %v809 = vadd.f32 %v773, 1.0
  %v810 = vadd.f32 %v775, 1.0
  %v811 = vadd.f32 %v777, 1.0
  %v812 = vadd.f32 %v779, 1.0
  %v813 = vadd.f32 %v781, 1.0
  %v814 = vrcp.pop %v782
  %v815 = vmul.f32 1.0, %v814
  %v816 = vrcp.pop %v783
  %v817 = vmul.f32 1.0, %v816
  %v818 = vrcp.pop %v784
  %v819 = vmul.f32 1.0, %v818
  %v820 = vrcp.pop %v785
  %v821 = vmul.f32 1.0, %v820
  %v822 = vrcp.pop %v786
  %v823 = vmul.f32 1.0, %v822
  %v824 = vrcp.pop %v787
  %v825 = vmul.f32 1.0, %v824
  %v826 = vrcp.pop %v788
  %v827 = vmul.f32 1.0, %v826
  %v828 = vrcp.pop %v789
  %v829 = vmul.f32 1.0, %v828
  %v830 = vrcp.pop %v790
  %v831 = vmul.f32 1.0, %v830
  %v832 = vrcp.pop %v791
  %v833 = vmul.f32 1.0, %v832
  %v834 = vrcp.pop %v792
  %v835 = vmul.f32 1.0, %v834
  %v836 = vrcp.pop %v793
  %v837 = vmul.f32 1.0, %v836
  %v838 = vrcp.pop %v794
  %v839 = vmul.f32 1.0, %v838
  %v840 = vrcp.pop %v795
  %v841 = vmul.f32 1.0, %v840
  %v842 = vrcp.pop %v796
  %v843 = vmul.f32 1.0, %v842
  %v844 = vrcp.pop %v797
  %v845 = vmul.f32 1.0, %v844
  %v846 = vrcp.pop %v798
  %v847 = vmul.f32 1.0, %v846
  %v848 = vrcp.pop %v799
  %v849 = vmul.f32 1.0, %v848
  %v850 = vrcp.pop %v800
  %v851 = vmul.f32 1.0, %v850
  %v852 = vrcp.pop %v801
  %v853 = vmul.f32 1.0, %v852
  %v854 = vrcp.pop %v802
  %v855 = vmul.f32 1.0, %v854
  %v856 = vrcp.pop %v803
  %v857 = vmul.f32 1.0, %v856
  %v858 = vrcp.pop %v804
  %v859 = vmul.f32 1.0, %v858
  %v860 = vrcp.pop %v805
  %v861 = vmul.f32 1.0, %v860
  %v862 = vrcp.pop %v806
  %v863 = vmul.f32 1.0, %v862
  %v864 = vrcp.pop %v807
  %v865 = vmul.f32 1.0, %v864
  %v866 = vrcp.pop %v808
  %v867 = vmul.f32 1.0, %v866
  %v868 = vrcp.pop %v809
  %v869 = vmul.f32 1.0, %v868
  %v870 = vrcp.pop %v810
  %v871 = vmul.f32 1.0, %v870
  %v872 = vrcp.pop %v811
  %v873 = vmul.f32 1.0, %v872
  %v874 = vrcp.pop %v812
  %v875 = vmul.f32 1.0, %v874
  %v876 = vrcp.pop %v813
  %v877 = vmul.f32 1.0, %v876
  %vm878 = vcmp.ge.f32.partialorder %v496, 0.0
  %vm879 = vcmp.ge.f32.partialorder %v501, 0.0
  %vm880 = vcmp.ge.f32.partialorder %v506, 0.0
  %vm881 = vcmp.ge.f32.partialorder %v511, 0.0
  %vm882 = vcmp.ge.f32.partialorder %v516, 0.0
  %vm883 = vcmp.ge.f32.partialorder %v521, 0.0
  %vm884 = vcmp.ge.f32.partialorder %v526, 0.0
  %vm885 = vcmp.ge.f32.partialorder %v531, 0.0
  %vm886 = vcmp.ge.f32.partialorder %v536, 0.0
  %vm887 = vcmp.ge.f32.partialorder %v541, 0.0
  %vm888 = vcmp.ge.f32.partialorder %v546, 0.0
  %vm889 = vcmp.ge.f32.partialorder %v551, 0.0
  %vm890 = vcmp.ge.f32.partialorder %v556, 0.0
  %vm891 = vcmp.ge.f32.partialorder %v561, 0.0
  %vm892 = vcmp.ge.f32.partialorder %v566, 0.0
  %vm893 = vcmp.ge.f32.partialorder %v571, 0.0
  %vm894 = vcmp.ge.f32.partialorder %v576, 0.0
  %vm895 = vcmp.ge.f32.partialorder %v581, 0.0
  %vm896 = vcmp.ge.f32.partialorder %v586, 0.0
  %vm897 = vcmp.ge.f32.partialorder %v591, 0.0
  %vm898 = vcmp.ge.f32.partialorder %v596, 0.0
  %vm899 = vcmp.ge.f32.partialorder %v601, 0.0
  %vm900 = vcmp.ge.f32.partialorder %v606, 0.0
  %vm901 = vcmp.ge.f32.partialorder %v611, 0.0
  %vm902 = vcmp.ge.f32.partialorder %v616, 0.0
  %vm903 = vcmp.ge.f32.partialorder %v621, 0.0
  %vm904 = vcmp.ge.f32.partialorder %v626, 0.0
  %vm905 = vcmp.ge.f32.partialorder %v631, 0.0
  %vm906 = vcmp.ge.f32.partialorder %v636, 0.0
  %vm907 = vcmp.ge.f32.partialorder %v641, 0.0
  %vm908 = vcmp.ge.f32.partialorder %v646, 0.0
  %vm909 = vcmp.ge.f32.partialorder %v651, 0.0
  %v910 = vsub.f32 1.0, %v815
  %v911 = vsub.f32 1.0, %v817
  %v912 = vsub.f32 1.0, %v819
  %v913 = vsub.f32 1.0, %v821
  %v914 = vsub.f32 1.0, %v823
  %v915 = vsub.f32 1.0, %v825
  %v916 = vsub.f32 1.0, %v827
  %v917 = vsub.f32 1.0, %v829
  %v918 = vsub.f32 1.0, %v831
  %v919 = vsub.f32 1.0, %v833
  %v920 = vsub.f32 1.0, %v835
  %v921 = vsub.f32 1.0, %v837
  %v922 = vsub.f32 1.0, %v839
  %v923 = vsub.f32 1.0, %v841
  %v924 = vsub.f32 1.0, %v843
  %v925 = vsub.f32 1.0, %v845
  %v926 = vsub.f32 1.0, %v847
  %v927 = vsub.f32 1.0, %v849
  %v928 = vsub.f32 1.0, %v851
  %v929 = vsub.f32 1.0, %v853
  %v930 = vsub.f32 1.0, %v855
  %v931 = vsub.f32 1.0, %v857
  %v932 = vsub.f32 1.0, %v859
  %v933 = vsub.f32 1.0, %v861
  %v934 = vsub.f32 1.0, %v863
  %v935 = vsub.f32 1.0, %v865
  %v936 = vsub.f32 1.0, %v867
  %v937 = vsub.f32 1.0, %v869
  %v938 = vsub.f32 1.0, %v871
  %v939 = vsub.f32 1.0, %v873
  %v940 = vsub.f32 1.0, %v875
  %v941 = vsub.f32 1.0, %v877
  %v942 = vsel %vm878, %v815, %v910
  %v943 = vsel %vm879, %v817, %v911
  %v944 = vsel %vm880, %v819, %v912
  %v945 = vsel %vm881, %v821, %v913
  %v946 = vsel %vm882, %v823, %v914
  %v947 = vsel %vm883, %v825, %v915
  %v948 = vsel %vm884, %v827, %v916
  %v949 = vsel %vm885, %v829, %v917
  %v950 = vsel %vm886, %v831, %v918
  %v951 = vsel %vm887, %v833, %v919
  %v952 = vsel %vm888, %v835, %v920
  %v953 = vsel %vm889, %v837, %v921
  %v954 = vsel %vm890, %v839, %v922
  %v955 = vsel %vm891, %v841, %v923
  %v956 = vsel %vm892, %v843, %v924
  %v957 = vsel %vm893, %v845, %v925
  %v958 = vsel %vm894, %v847, %v926
  %v959 = vsel %vm895, %v849, %v927
  %v960 = vsel %vm896, %v851, %v928
  %v961 = vsel %vm897, %v853, %v929
  %v962 = vsel %vm898, %v855, %v930
  %v963 = vsel %vm899, %v857, %v931
  %v964 = vsel %vm900, %v859, %v932
  %v965 = vsel %vm901, %v861, %v933
  %v966 = vsel %vm902, %v863, %v934
  %v967 = vsel %vm903, %v865, %v935
  %v968 = vsel %vm904, %v867, %v936
  %v969 = vsel %vm905, %v869, %v937
  %v970 = vsel %vm906, %v871, %v938
  %v971 = vsel %vm907, %v873, %v939
  %v972 = vsel %vm908, %v875, %v940
  %v973 = vsel %vm909, %v877, %v941
  %vm974 = vcmask 31744
  %975 = vst.msk [vmem:[%s3] sm:$0xff] %vm974, %v942
  %976 = vst.msk [vmem:[%s3 + $0x8] sm:$0xff] %vm974, %v943
  %977 = vst.msk [vmem:[%s3 + $0x10] sm:$0xff] %vm974, %v944
  %978 = vst.msk [vmem:[%s3 + $0x18] sm:$0xff] %vm974, %v945
  %979 = vst.msk [vmem:[%s3 + $0x20] sm:$0xff] %vm974, %v946
  %980 = vst.msk [vmem:[%s3 + $0x28] sm:$0xff] %vm974, %v947
  %981 = vst.msk [vmem:[%s3 + $0x30] sm:$0xff] %vm974, %v948
  %982 = vst.msk [vmem:[%s3 + $0x38] sm:$0xff] %vm974, %v949
  %983 = vst.msk [vmem:[%s3 + $0x40] sm:$0xff] %vm974, %v950
  %984 = vst.msk [vmem:[%s3 + $0x48] sm:$0xff] %vm974, %v951
  %985 = vst.msk [vmem:[%s3 + $0x50] sm:$0xff] %vm974, %v952
  %986 = vst.msk [vmem:[%s3 + $0x58] sm:$0xff] %vm974, %v953
  %987 = vst.msk [vmem:[%s3 + $0x60] sm:$0xff] %vm974, %v954
  %988 = vst.msk [vmem:[%s3 + $0x68] sm:$0xff] %vm974, %v955
  %989 = vst.msk [vmem:[%s3 + $0x70] sm:$0xff] %vm974, %v956
  %990 = vst.msk [vmem:[%s3 + $0x78] sm:$0xff] %vm974, %v957
  %991 = vst.msk [vmem:[%s3 + $0x80] sm:$0xff] %vm974, %v958
  %992 = vst.msk [vmem:[%s3 + $0x88] sm:$0xff] %vm974, %v959
  %993 = vst.msk [vmem:[%s3 + $0x90] sm:$0xff] %vm974, %v960
  %994 = vst.msk [vmem:[%s3 + $0x98] sm:$0xff] %vm974, %v961
  %995 = vst.msk [vmem:[%s3 + $0xa0] sm:$0xff] %vm974, %v962
  %996 = vst.msk [vmem:[%s3 + $0xa8] sm:$0xff] %vm974, %v963
  %997 = vst.msk [vmem:[%s3 + $0xb0] sm:$0xff] %vm974, %v964
  %998 = vst.msk [vmem:[%s3 + $0xb8] sm:$0xff] %vm974, %v965
  %999 = vst.msk [vmem:[%s3 + $0xc0] sm:$0xff] %vm974, %v966
  %1000 = vst.msk [vmem:[%s3 + $0xc8] sm:$0xff] %vm974, %v967
  %1001 = vst.msk [vmem:[%s3 + $0xd0] sm:$0xff] %vm974, %v968
  %1002 = vst.msk [vmem:[%s3 + $0xd8] sm:$0xff] %vm974, %v969
  %1003 = vst.msk [vmem:[%s3 + $0xe0] sm:$0xff] %vm974, %v970
  %1004 = vst.msk [vmem:[%s3 + $0xe8] sm:$0xff] %vm974, %v971
  %1005 = vst.msk [vmem:[%s3 + $0xf0] sm:$0xff] %vm974, %v972
  %1006 = vst.msk [vmem:[%s3 + $0xf8] sm:$0xff] %vm974, %v973
  // Predicated region
  $region14: #{linear_r_deep_network_forward.1} parent=0 // pred_check
    _
  $region15: #{linear_r_deep_network_forward.1} parent=0 // pred_check_branch
    %1008 = sbr.rel (0) target = $region17
  $region16: #{linear_r_deep_network_forward.1} parent=0 // pred_region
    _
  $region17: #{linear_r_deep_network_forward.1} parent=0 // pred_fallthru
    _
  // Predicated region
  $region18: #{linear_r_deep_network_forward.1} parent=0 // pred_check
    _
  $region19: #{linear_r_deep_network_forward.1} parent=0 // pred_check_branch
    %1010 = sbr.rel (0) target = $region21
  $region20: #{linear_r_deep_network_forward.1} parent=0 // pred_region
    _
  $region21: #{linear_r_deep_network_forward.1} parent=0 // pred_fallthru
    _

</llo_original>
